<compile_context>
chip_gen: v5e
topology: v5e:2x2
jax: 0.10.0
libtpu: 0.0.40
codegen_flags: <defaults>
</compile_context>

<pallas_src>
import jax
import jax.numpy as jnp
from jax.experimental import pallas as pl
from jax.experimental.pallas import tpu as pltpu


def student_head_kernel(x_ref, w1_ref, b1_ref, w2_ref, b2_ref, w3_ref, b3_ref, o_ref):
    x = x_ref[...]

    # fc1 + leaky_relu (negative_slope = 0.01, PyTorch default)
    h1 = jnp.dot(x, w1_ref[...], preferred_element_type=jnp.float32) + b1_ref[...]
    h1 = jnp.where(h1 > 0, h1, 0.01 * h1)

    # fc2 + leaky_relu
    h2 = jnp.dot(h1, w2_ref[...], preferred_element_type=jnp.float32) + b2_ref[...]
    h2 = jnp.where(h2 > 0, h2, 0.01 * h2)

    # fc3: N=1, so skip the MXU -> VPU elementwise mul + lane reduce (XLU slot, ~free).
    # w3_ref is pre-reshaped to [1, 64] wrapper-side; b3 is a (1,1) SMEM scalar.
    out = jnp.sum(h2 * w3_ref[...], axis=-1, keepdims=True) + b3_ref[0, 0]
    o_ref[...] = out.astype(o_ref.dtype)


def _round_up(x, m):
    return ((x + m - 1) // m) * m


def _choose_tb(dim, vmem_budget_bytes=24 << 20):
    """Largest batch tile (multiple of 8, capped at 1024) fitting the VMEM budget.

    Budget accounting (f32):
      resident: w1[dim,128] + w2[128,64] + w3[1,64] + b1[1,128] + b2[1,64]
      per row : double-buffered x tile (2*dim) + double-buffered out tile (2*1)
                + h1 (128) + h2 (64) intermediates.
    """
    resident = (dim * 128 + 128 * 64 + 64 + 128 + 64) * 4
    budget = max(vmem_budget_bytes - resident, 1 << 20)
    per_row = (2 * dim + 2 * 1 + 128 + 64) * 4
    tb = max(8, min(1024, budget // per_row))
    return (tb // 8) * 8


def student_head_forward(g_enc, params, tb=None):
    """params: dict with w1[dim,128], b1[1,128], w2[128,64], b2[1,64], w3[64,1], b3[1,1]."""
    B, dim = g_enc.shape
    if tb is None:
        tb = _choose_tb(dim)
    # Never use a tile larger than the (sublane-rounded) batch itself.
    tb = min(tb, _round_up(max(B, 1), 8))

    w1 = params["w1"].astype(jnp.float32)
    b1 = params["b1"].astype(jnp.float32)
    w2 = params["w2"].astype(jnp.float32)
    b2 = params["b2"].astype(jnp.float32)
    w3_row = params["w3"].astype(jnp.float32).reshape(1, 64)  # reshape once, outside the kernel
    b3 = params["b3"].astype(jnp.float32).reshape(1, 1)

    # Ragged batch handled by Pallas itself (cdiv grid + clipped last block);
    # no wrapper-side pad/copy of x.
    grid = (pl.cdiv(B, tb),)
    out = pl.pallas_call(
        student_head_kernel,
        out_shape=jax.ShapeDtypeStruct((B, 1), jnp.float32),
        grid=grid,
        in_specs=[
            pl.BlockSpec((tb, dim), lambda i: (i, 0)),          # x: streamed per tile
            pl.BlockSpec((dim, 128), lambda i: (0, 0)),         # w1: resident
            pl.BlockSpec((1, 128), lambda i: (0, 0)),           # b1: resident
            pl.BlockSpec((128, 64), lambda i: (0, 0)),          # w2: resident
            pl.BlockSpec((1, 64), lambda i: (0, 0)),            # b2: resident
            pl.BlockSpec((1, 64), lambda i: (0, 0)),            # w3 (as row): resident
            pl.BlockSpec(memory_space=pltpu.MemorySpace.SMEM),  # b3: scalar in SMEM
        ],
        out_specs=pl.BlockSpec((tb, 1), lambda i: (i, 0)),
        compiler_params=pltpu.CompilerParams(
            dimension_semantics=("parallel",),  # v7x: shard batch tiles across both TCs
        ),
    )(g_enc.astype(jnp.float32), w1, b1, w2, b2, w3_row, b3)

    return out


def init_params(key, dim):
    """Deterministic init mimicking nn.Linear default (uniform +/- 1/sqrt(fan_in))."""
    ks = jax.random.split(key, 6)

    def linear(kw, kb, fan_in, fan_out):
        bound = 1.0 / jnp.sqrt(jnp.float32(fan_in))
        w = jax.random.uniform(kw, (fan_in, fan_out), jnp.float32, -bound, bound)
        b = jax.random.uniform(kb, (1, fan_out), jnp.float32, -bound, bound)
        return w, b

    w1, b1 = linear(ks[0], ks[1], dim, 128)
    w2, b2 = linear(ks[2], ks[3], 128, 64)
    w3, b3 = linear(ks[4], ks[5], 64, 1)
    return dict(w1=w1, b1=b1, w2=w2, b2=b2, w3=w3, b3=b3)


def reference_forward(g_enc, p):
    lrelu = lambda x: jnp.where(x > 0, x, 0.01 * x)
    h = lrelu(g_enc @ p["w1"] + p["b1"])
    h = lrelu(h @ p["w2"] + p["b2"])
    return h @ p["w3"] + p["b3"]


if __name__ == "__main__":
    key = jax.random.PRNGKey(0)
    k_in, k_in2, k_p = jax.random.split(key, 3)

    dim = 32
    params = init_params(k_p, dim)

    # Small batch, evenly divisible tile.
    B = 8
    g_enc = jax.random.normal(k_in, (B, dim), jnp.float32)
    out = jax.block_until_ready(student_head_forward(g_enc, params))
    ref = reference_forward(g_enc, params)
    assert out.shape == (B, 1)
    assert jnp.allclose(out, ref, atol=1e-5, rtol=1e-5)

    # Ragged batch (exercises the clipped last grid block; no pad copy of x).
    B2 = 37
    g_enc2 = jax.random.normal(k_in2, (B2, dim), jnp.float32)
    out2 = jax.block_until_ready(student_head_forward(g_enc2, params, tb=16))
    ref2 = reference_forward(g_enc2, params)
    assert out2.shape == (B2, 1)
    assert jnp.allclose(out2, ref2, atol=1e-5, rtol=1e-5)

    print("KERNEL_OK")
</pallas_src>

<mosaic_0001>
module attributes {stable_mosaic.version = 11 : i64} {
  func.func @student_head_kernel(%arg0: i32, %arg1: memref<8x32xf32, #tpu.memory_space<vmem>>, %arg2: memref<32x128xf32, #tpu.memory_space<vmem>>, %arg3: memref<1x128xf32, #tpu.memory_space<vmem>>, %arg4: memref<128x64xf32, #tpu.memory_space<vmem>>, %arg5: memref<1x64xf32, #tpu.memory_space<vmem>>, %arg6: memref<1x64xf32, #tpu.memory_space<vmem>>, %arg7: memref<1x1xf32, #tpu.memory_space<smem>>, %arg8: memref<8x1xf32, #tpu.memory_space<vmem>>) attributes {dimension_semantics = [#tpu.dimension_semantics<parallel>], iteration_bounds = array<i64: 1>, scalar_prefetch = 0 : i64, scratch_operands = 0 : i64, tpu.core_type = #tpu.core_type<tc>, window_params = [{transform_indices = @transform_0, window_bounds = array<i64: 8, 32>}, {pipeline_mode = #tpu.pipeline_mode<synchronous>, transform_indices = @transform_1, window_bounds = array<i64: 32, 128>}, {pipeline_mode = #tpu.pipeline_mode<synchronous>, transform_indices = @transform_2, window_bounds = array<i64: 1, 128>}, {pipeline_mode = #tpu.pipeline_mode<synchronous>, transform_indices = @transform_3, window_bounds = array<i64: 128, 64>}, {pipeline_mode = #tpu.pipeline_mode<synchronous>, transform_indices = @transform_4, window_bounds = array<i64: 1, 64>}, {pipeline_mode = #tpu.pipeline_mode<synchronous>, transform_indices = @transform_5, window_bounds = array<i64: 1, 64>}, {transform_indices = @transform_6, window_bounds = array<i64: 1, 1>}, {transform_indices = @transform_7, window_bounds = array<i64: 8, 1>}]} {
    %c0 = arith.constant 0 : index
    %c0_0 = arith.constant 0 : index
    %0 = vector.load %arg1[%c0, %c0_0] : memref<8x32xf32, #tpu.memory_space<vmem>>, vector<8x32xf32>
    %c0_1 = arith.constant 0 : index
    %c0_2 = arith.constant 0 : index
    %1 = vector.load %arg2[%c0_1, %c0_2] : memref<32x128xf32, #tpu.memory_space<vmem>>, vector<32x128xf32>
    %cst = arith.constant dense<0.000000e+00> : vector<8x128xf32>
    %2 = tpu.matmul %0, %1, %cst {dimension_numbers = #tpu.dot_dimension_numbers<[1], [0], [0], [1], [0, 0, 1, 1], [], []>} : vector<8x32xf32>, vector<32x128xf32>, vector<8x128xf32> -> vector<8x128xf32>
    %c0_3 = arith.constant 0 : index
    %c0_4 = arith.constant 0 : index
    %3 = vector.load %arg3[%c0_3, %c0_4] : memref<1x128xf32, #tpu.memory_space<vmem>>, vector<1x128xf32>
    %4 = vector.broadcast %3 : vector<1x128xf32> to vector<8x128xf32>
    %5 = arith.addf %2, %4 : vector<8x128xf32>
    %cst_5 = arith.constant 0.000000e+00 : f32
    %6 = vector.broadcast %cst_5 : f32 to vector<8x128xf32>
    %7 = arith.cmpf ogt, %5, %6 : vector<8x128xf32>
    %cst_6 = arith.constant 0.00999999977 : f32
    %8 = vector.broadcast %cst_6 : f32 to vector<8x128xf32>
    %9 = arith.mulf %8, %5 : vector<8x128xf32>
    %10 = arith.select %7, %5, %9 : vector<8x128xi1>, vector<8x128xf32>
    %c0_7 = arith.constant 0 : index
    %c0_8 = arith.constant 0 : index
    %11 = vector.load %arg4[%c0_7, %c0_8] : memref<128x64xf32, #tpu.memory_space<vmem>>, vector<128x64xf32>
    %cst_9 = arith.constant dense<0.000000e+00> : vector<8x64xf32>
    %12 = tpu.matmul %10, %11, %cst_9 {dimension_numbers = #tpu.dot_dimension_numbers<[1], [0], [0], [1], [0, 0, 1, 1], [], []>} : vector<8x128xf32>, vector<128x64xf32>, vector<8x64xf32> -> vector<8x64xf32>
    %c0_10 = arith.constant 0 : index
    %c0_11 = arith.constant 0 : index
    %13 = vector.load %arg5[%c0_10, %c0_11] : memref<1x64xf32, #tpu.memory_space<vmem>>, vector<1x64xf32>
    %14 = vector.broadcast %13 : vector<1x64xf32> to vector<8x64xf32>
    %15 = arith.addf %12, %14 : vector<8x64xf32>
    %cst_12 = arith.constant 0.000000e+00 : f32
    %16 = vector.broadcast %cst_12 : f32 to vector<8x64xf32>
    %17 = arith.cmpf ogt, %15, %16 : vector<8x64xf32>
    %cst_13 = arith.constant 0.00999999977 : f32
    %18 = vector.broadcast %cst_13 : f32 to vector<8x64xf32>
    %19 = arith.mulf %18, %15 : vector<8x64xf32>
    %20 = arith.select %17, %15, %19 : vector<8x64xi1>, vector<8x64xf32>
    %c0_14 = arith.constant 0 : index
    %c0_15 = arith.constant 0 : index
    %21 = vector.load %arg6[%c0_14, %c0_15] : memref<1x64xf32, #tpu.memory_space<vmem>>, vector<1x64xf32>
    %22 = vector.broadcast %21 : vector<1x64xf32> to vector<8x64xf32>
    %23 = arith.mulf %20, %22 : vector<8x64xf32>
    %cst_16 = arith.constant dense<0.000000e+00> : vector<8xf32>
    %24 = vector.multi_reduction <add>, %23, %cst_16 [1] : vector<8x64xf32> to vector<8xf32>
    %25 = vector.shape_cast %24 : vector<8xf32> to vector<8x1xf32>
    %c0_17 = arith.constant 0 : index
    %c0_18 = arith.constant 0 : index
    %26 = memref.load %arg7[%c0_17, %c0_18] : memref<1x1xf32, #tpu.memory_space<smem>>
    %27 = vector.broadcast %26 : f32 to vector<8x1xf32>
    %28 = arith.addf %25, %27 : vector<8x1xf32>
    %c0_19 = arith.constant 0 : index
    %c0_20 = arith.constant 0 : index
    %29 = vector.load %arg8[%c0_19, %c0_20] : memref<8x1xf32, #tpu.memory_space<vmem>>, vector<8x1xf32>
    tpu.vector_store %arg8[%c0_19, %c0_20], %28 {strides = array<i32>} : memref<8x1xf32, #tpu.memory_space<vmem>>, vector<8x1xf32>,
    return
  }
  func.func @transform_0(%arg0: i32) -> (i32, i32) {
    %c0_i32 = arith.constant 0 : i32
    %c0_i32_0 = arith.constant 0 : i32
    return %arg0, %c0_i32 : i32, i32
  }
  func.func @transform_1(%arg0: i32) -> (i32, i32) {
    %c0_i32 = arith.constant 0 : i32
    %c0_i32_0 = arith.constant 0 : i32
    %c0_i32_1 = arith.constant 0 : i32
    return %c0_i32, %c0_i32_0 : i32, i32
  }
  func.func @transform_2(%arg0: i32) -> (i32, i32) {
    %c0_i32 = arith.constant 0 : i32
    %c0_i32_0 = arith.constant 0 : i32
    %c0_i32_1 = arith.constant 0 : i32
    return %c0_i32, %c0_i32_0 : i32, i32
  }
  func.func @transform_3(%arg0: i32) -> (i32, i32) {
    %c0_i32 = arith.constant 0 : i32
    %c0_i32_0 = arith.constant 0 : i32
    %c0_i32_1 = arith.constant 0 : i32
    return %c0_i32, %c0_i32_0 : i32, i32
  }
  func.func @transform_4(%arg0: i32) -> (i32, i32) {
    %c0_i32 = arith.constant 0 : i32
    %c0_i32_0 = arith.constant 0 : i32
    %c0_i32_1 = arith.constant 0 : i32
    return %c0_i32, %c0_i32_0 : i32, i32
  }
  func.func @transform_5(%arg0: i32) -> (i32, i32) {
    %c0_i32 = arith.constant 0 : i32
    %c0_i32_0 = arith.constant 0 : i32
    %c0_i32_1 = arith.constant 0 : i32
    return %c0_i32, %c0_i32_0 : i32, i32
  }
  func.func @transform_6(%arg0: i32) -> (i32, i32) {
    %c0_i32 = arith.constant 0 : i32
    %c0_i32_0 = arith.constant 0 : i32
    %c0_i32_1 = arith.constant 0 : i32
    return %c0_i32, %c0_i32_0 : i32, i32
  }
  func.func @transform_7(%arg0: i32) -> (i32, i32) {
    %c0_i32 = arith.constant 0 : i32
    %c0_i32_0 = arith.constant 0 : i32
    return %arg0, %c0_i32 : i32, i32
  }
}

</mosaic_0001>

<llo_original>
// kernel: tpu_custom_call.1
$region0: #{tpu_custom_call.1}
  #allocation0 [shape = 'u32[]', space=smem, size = 0x4, offset = 0x4, fixed_abs, tag = 'smem constant byte address 0x4 - core index']
  #allocation1 [shape = 'u32[72,128]{1,0:T(1,128)}', space=vmem, size = 0x9000, scoped, tag = 'internal scratch']
  #allocation2 [shape = 'f32[1,1]{1,0:T(1,128)S(6)}', space=smem, size = 0x200, scoped, tag = 'scoped memory for tpu_custom_call.1']
  %s0 = inlined_call_operand.vmem [shape: f32[8,32], index: 0, kind: input, shape index: {}]
  %s1 = inlined_call_operand.vmem [shape: f32[32,128], index: 1, kind: input, shape index: {}]
  %s2 = inlined_call_operand.vmem [shape: f32[1,128], index: 2, kind: input, shape index: {}]
  %s3 = inlined_call_operand.vmem [shape: f32[128,64], index: 3, kind: input, shape index: {}]
  %s4 = inlined_call_operand.vmem [shape: f32[1,64], index: 4, kind: input, shape index: {}]
  %s5 = inlined_call_operand.vmem [shape: f32[1,64], index: 5, kind: input, shape index: {}]
  %s6 = inlined_call_operand.<no memory space> [shape: f32[1,1], index: 6, kind: input, shape index: {}]
  %s7 = inlined_call_operand.vmem [shape: f32[8,1], index: 7, kind: output, shape index: {}]
  %s8 = sld [smem:[#allocation0]]
  $region38: #{tpu_custom_call.1} parent=0
    _
  %s10 = ssub.s32 1, %s8
  %s11 = scalar_select 0, %s10, %s8
  %12 = sst [smem:[#allocation2]] %s6
  // Predicated region
  $region2: #{tpu_custom_call.1} parent=0 // pred_check
    _
  $region3: #{tpu_custom_call.1} parent=0 // pred_check_branch
    %14 = sbr.rel (0) target = $region5
  $region4: #{tpu_custom_call.1} parent=0 // pred_region
    _
  $region5: #{tpu_custom_call.1} parent=0 // pred_fallthru
    _
  // Predicated region
  $region6: #{tpu_custom_call.1} parent=0 // pred_check
    _
  $region7: #{tpu_custom_call.1} parent=0 // pred_check_branch
    %16 = sbr.rel (0) target = $region9
  $region8: #{tpu_custom_call.1} parent=0 // pred_region
    _
  $region9: #{tpu_custom_call.1} parent=0 // pred_fallthru
    _
  // Predicated region
  $region10: #{tpu_custom_call.1} parent=0 // pred_check
    _
  $region11: #{tpu_custom_call.1} parent=0 // pred_check_branch
    %18 = sbr.rel (0) target = $region13
  $region12: #{tpu_custom_call.1} parent=0 // pred_region
    _
  $region13: #{tpu_custom_call.1} parent=0 // pred_fallthru
    _
  // Predicated region
  $region14: #{tpu_custom_call.1} parent=0 // pred_check
    _
  $region15: #{tpu_custom_call.1} parent=0 // pred_check_branch
    %20 = sbr.rel (0) target = $region17
  $region16: #{tpu_custom_call.1} parent=0 // pred_region
    _
  $region17: #{tpu_custom_call.1} parent=0 // pred_fallthru
    _
  // Predicated region
  $region18: #{tpu_custom_call.1} parent=0 // pred_check
    _
  $region19: #{tpu_custom_call.1} parent=0 // pred_check_branch
    %22 = sbr.rel (0) target = $region21
  $region20: #{tpu_custom_call.1} parent=0 // pred_region
    _
  $region21: #{tpu_custom_call.1} parent=0 // pred_fallthru
    _
  // Predicated region
  $region22: #{tpu_custom_call.1} parent=0 // pred_check
    _
  $region23: #{tpu_custom_call.1} parent=0 // pred_check_branch
    %24 = sbr.rel (0) target = $region25
  $region24: #{tpu_custom_call.1} parent=0 // pred_region
    _
  $region25: #{tpu_custom_call.1} parent=0 // pred_fallthru
    _
  // Predicated region
  $region26: #{tpu_custom_call.1} parent=0 // pred_check
    _
  $region27: #{tpu_custom_call.1} parent=0 // pred_check_branch
    %26 = sbr.rel (0) target = $region29
  $region28: #{tpu_custom_call.1} parent=0 // pred_region
    _
  $region29: #{tpu_custom_call.1} parent=0 // pred_fallthru
    _
  %v27 = vld [vmem:[%s0] sm:$0xff]
  %v28 = vld [vmem:[%s1] sm:$0xff]
  %v29 = vld [vmem:[%s1 + $0x8] sm:$0xff]
  %v30 = vld [vmem:[%s1 + $0x10] sm:$0xff]
  %v31 = vld [vmem:[%s1 + $0x18] sm:$0xff]
  %v32 = vld [vmem:[%s2] sm:$0x1]
  %v34 = vperm.slane %v32, 0
  %vm36 = vcmask 261120
  %v38 = vsel %vm36, %v27, 0
  %40 = vmatpush.msra.mxu0 0.0
  %41 = vmatpush.msra.mxu0 0.0
  %42 = vmatpush.msra.mxu0 0.0
  %43 = vmatpush.msra.mxu0 0.0
  %44 = vmatpush.msra.mxu0 0.0
  %45 = vmatpush.msra.mxu0 0.0
  %46 = vmatpush.msra.mxu0 0.0
  %47 = vmatpush.msra.mxu0 0.0
  %48 = vmatpush.msra.mxu0 0.0
  %49 = vmatpush.msra.mxu0 0.0
  %50 = vmatpush.msra.mxu0 0.0
  %51 = vmatpush.msra.mxu0 0.0
  %52 = vmatpush.msra.mxu0 %v31
  %53 = vmatpush.msra.mxu0 %v30
  %54 = vmatpush.msra.mxu0 %v29
  %55 = vmatpush.msra.mxu0 %v28
  %56 = vmatmul.f32.gmra.mxu0 %v38
  %v57 = vpop.f32.mrf.mxu0
  %v58 = vadd.f32 %v34, %v57
  %59 = vdwg.mxu0
  %vm60 = vcmp.gt.f32.partialorder %v58, 0.0
  %v61 = vmul.f32 %v58, 0.01
  %v62 = vsel %vm60, %v58, %v61
  %v63 = vld [vmem:[%s3] sm:$0xff]
  %v64 = vld [vmem:[%s3 + $0x8] sm:$0xff]
  %v65 = vld [vmem:[%s3 + $0x10] sm:$0xff]
  %v66 = vld [vmem:[%s3 + $0x18] sm:$0xff]
  %v67 = vld [vmem:[%s3 + $0x20] sm:$0xff]
  %v68 = vld [vmem:[%s3 + $0x28] sm:$0xff]
  %v69 = vld [vmem:[%s3 + $0x30] sm:$0xff]
  %v70 = vld [vmem:[%s3 + $0x38] sm:$0xff]
  %v71 = vld [vmem:[%s3 + $0x40] sm:$0xff]
  %v72 = vld [vmem:[%s3 + $0x48] sm:$0xff]
  %v73 = vld [vmem:[%s3 + $0x50] sm:$0xff]
  %v74 = vld [vmem:[%s3 + $0x58] sm:$0xff]
  %v75 = vld [vmem:[%s3 + $0x60] sm:$0xff]
  %v76 = vld [vmem:[%s3 + $0x68] sm:$0xff]
  %v77 = vld [vmem:[%s3 + $0x70] sm:$0xff]
  %v78 = vld [vmem:[%s3 + $0x78] sm:$0xff]
  %v79 = vld [vmem:[%s4] sm:$0x1]
  %v81 = vperm.slane %v79, 0
  %83 = vmatpush.msra.mxu0 %v78
  %84 = vmatpush.msra.mxu0 %v77
  %85 = vmatpush.msra.mxu0 %v76
  %86 = vmatpush.msra.mxu0 %v75
  %87 = vmatpush.msra.mxu0 %v74
  %88 = vmatpush.msra.mxu0 %v73
  %89 = vmatpush.msra.mxu0 %v72
  %90 = vmatpush.msra.mxu0 %v71
  %91 = vmatpush.msra.mxu0 %v70
  %92 = vmatpush.msra.mxu0 %v69
  %93 = vmatpush.msra.mxu0 %v68
  %94 = vmatpush.msra.mxu0 %v67
  %95 = vmatpush.msra.mxu0 %v66
  %96 = vmatpush.msra.mxu0 %v65
  %97 = vmatpush.msra.mxu0 %v64
  %98 = vmatpush.msra.mxu0 %v63
  %99 = vmatmul.f32.gmra.mxu0 %v62
  %v100 = vpop.f32.mrf.mxu0
  %v101 = vadd.f32 %v81, %v100
  %102 = vdwg.mxu0
  %vm103 = vcmp.gt.f32.partialorder %v101, 0.0
  %v104 = vmul.f32 %v101, 0.01
  %v105 = vsel %vm103, %v101, %v104
  %v106 = vld [vmem:[%s5] sm:$0x1]
  %v108 = vperm.slane %v106, 0
  %v110 = vmul.f32 %v105, %v108
  %vm111 = vcmask 523264
  %v112 = vsel %vm111, %v110, 0.0
  %113 = vadd.xlane.f32.xlu0 %v112
  %v114 = vpop.xlane.xlu0 %113
  %s115 = sld [smem:[#allocation2]]
  %v116 = vstv %s115
  %v117 = vadd.f32 %v114, %v116
  %vm118 = vcmask 7168
  %119 = vst.msk [vmem:[%s7] sm:$0xff] %vm118, %v117
  // Predicated region
  $region30: #{tpu_custom_call.1} parent=0 // pred_check
    _
  $region31: #{tpu_custom_call.1} parent=0 // pred_check_branch
    %121 = sbr.rel (0) target = $region33
  $region32: #{tpu_custom_call.1} parent=0 // pred_region
    _
  $region33: #{tpu_custom_call.1} parent=0 // pred_fallthru
    _
  // Predicated region
  $region34: #{tpu_custom_call.1} parent=0 // pred_check
    _
  $region35: #{tpu_custom_call.1} parent=0 // pred_check_branch
    %123 = sbr.rel (0) target = $region37
  $region36: #{tpu_custom_call.1} parent=0 // pred_region
    _
  $region37: #{tpu_custom_call.1} parent=0 // pred_fallthru
    _

</llo_original>
